<compile_context>
chip_gen: v5e
topology: v5e:2x2
jax: 0.10.0
libtpu: 0.0.40
codegen_flags: <defaults>
</compile_context>

<pallas_src>
import jax
import jax.numpy as jnp
from jax.experimental import pallas as pl
from jax.experimental.pallas import tpu as pltpu


def attn_agg_kernel(x_ref, w1_ref, b1_ref, w2_ref, o_ref):
    # x_ref: (TB, F, D)  w1_ref: (D, H)  b1_ref: (1, H)  w2_ref: (1, H)  o_ref: (TB, D)
    TB, F, D = x_ref.shape
    H = w1_ref.shape[1]

    x = x_ref[...]                                     # (TB, F, D), caller dtype

    # Linear(emb -> hidden) + ReLU as one (TB*F, D) @ (D, H) MXU matmul with f32
    # accumulation (collapsing leading dims keeps D minor, no lane relayout).
    x2 = x.reshape(TB * F, D)
    h = jnp.dot(x2, w1_ref[...], preferred_element_type=jnp.float32)
    h = jnp.maximum(h + b1_ref[...].astype(jnp.float32), 0.0)      # (TB*F, H) f32

    # Linear(hidden -> 1, bias=False) as VPU multiply + lane reduction.  Scores land
    # as (TB, F) with F on the lane axis (no degenerate N=1 matmul / width-1 softmax).
    h3 = h.reshape(TB, F, H)
    w2_row = w2_ref[...].astype(jnp.float32)            # (1, H), broadcasts over (TB, F)
    s = jnp.sum(h3 * w2_row, axis=-1)                   # (TB, F), f32

    # Softmax over the field axis (dim=1 of the original (B, F, 1) tensor).
    # Exact divide: approx vrcp cost the previous revision its tolerance.
    s = s - jnp.max(s, axis=-1, keepdims=True)
    e = jnp.exp(s)
    a = e / jnp.sum(e, axis=-1, keepdims=True)           # (TB, F), f32

    # Weighted sum over fields -> dense (TB, D) slab.  The multiply promotes x
    # element-wise (fused, no materialized f32 copy of the tile); the F-axis
    # reduction accumulates in f32.
    o_ref[...] = jnp.sum(a[:, :, None] * x, axis=1).astype(o_ref.dtype)


def _round_up(n, m):
    return ((n + m - 1) // m) * m


def _vmem_capacity_bytes():
    # Per-generation physical VMEM; fall back to the smallest (v7x: 64 MiB / TC)
    # when the query is unavailable (e.g. interpret mode / no local TPU).
    try:
        return int(pltpu.get_tpu_info().vmem_capacity_bytes)
    except Exception:
        return 64 * 1024 * 1024


def attentional_aggregation(x, w1, b1, w2, *, tb=None, compute_dtype=None):
    """InterHAt AttentionalAggregation forward.

    x: (B, F, D)   w1: (D, H)   b1: (H,) or (1, H)   w2: (H, 1) or (H,)  ->  (B, D)
    """
    B, F, D = x.shape
    H = w1.shape[1]

    # Optional bandwidth optimization: stream x / w1 as bf16 (halves HBM bytes for
    # this HBM-bound kernel and hits the native bf16 MXU path).  Off by default.
    if compute_dtype is not None:
        x = x.astype(compute_dtype)
        w1 = w1.astype(compute_dtype)

    b1 = b1.reshape(1, H)
    w2_row = w2.reshape(1, H)

    x_isz = jnp.dtype(x.dtype).itemsize
    w_isz = jnp.dtype(w1.dtype).itemsize
    o_isz = x_isz

    # ---- per-generation VMEM budget ---------------------------------------------
    vmem_phys = _vmem_capacity_bytes()
    vmem_budget = int(vmem_phys * 0.6)                   # per-step live-set target
    vmem_limit = max(min(int(vmem_phys * 0.75), vmem_phys - (8 << 20)), 16 << 20)

    # VMEM footprint of one grid step, accounting for (8,128) lane padding of
    # D < 128 / F < 8 tiles, the f32 h intermediate, the f32 weighted-sum temp,
    # double-buffered x/out, resident weights, plus relayout slack.
    Dp, Hp, Fp = _round_up(D, 128), _round_up(H, 128), _round_up(F, 8)

    def footprint(tb_):
        x_tile = tb_ * Fp * Dp * x_isz
        h_tile = _round_up(tb_ * F, 8) * Hp * 4
        f32_tmp = tb_ * Fp * Dp * 4
        out_tile = _round_up(tb_, 8) * Dp * o_isz
        weights = (_round_up(D, 8) * Hp + 2 * 8 * Hp) * w_isz
        return 3 * x_tile + h_tile + f32_tmp + 2 * out_tile + 2 * weights

    # ---- batch-tile size: DMA granularity first, VMEM cap second ------------------
    if tb is None:
        if B <= 8:
            tb = B                                        # single full tile
        else:
            # ~2-4 MiB of x per grid step: per-step pipeline overhead is ~0.35 us so
            # tiny tiles are overhead-dominated; beyond a few MiB the HBM roofline
            # flattens out (~85%).
            target = (4 << 20) if vmem_budget >= (48 << 20) else (2 << 20)
            tb = max(8, 8 * ((target // max(1, F * D * x_isz)) // 8))
            while tb > 8 and footprint(tb) > vmem_budget:
                tb = max(8, 8 * ((tb * 3 // 4) // 8))
            if B >= 16:
                # At least two grid steps: both v7x TensorCores get work and the
                # input pipeline has something to overlap with.
                tb = min(tb, 8 * pl.cdiv(pl.cdiv(B, 2), 8))
            if tb >= B:
                tb = B
    grid_b = pl.cdiv(B, tb)

    cost = pl.CostEstimate(
        flops=2 * B * F * D * H + 2 * B * F * H + 2 * B * F * D + 6 * B * F,
        transcendentals=B * F,
        bytes_accessed=x_isz * B * F * D + o_isz * B * D + w_isz * (D * H + 2 * H),
    )

    return pl.pallas_call(
        attn_agg_kernel,
        out_shape=jax.ShapeDtypeStruct((B, D), x.dtype),
        grid=(grid_b,),
        in_specs=[
            # TB batch rows per step; ragged last block handled as a partial block
            # (rows are independent, so OOB rows never reach valid outputs).
            pl.BlockSpec((tb, F, D), lambda b: (b, 0, 0)),
            # Weights: constant index_map -> fetched once, resident across the grid.
            pl.BlockSpec((D, H), lambda b: (0, 0)),
            pl.BlockSpec((1, H), lambda b: (0, 0)),
            pl.BlockSpec((1, H), lambda b: (0, 0)),
        ],
        out_specs=pl.BlockSpec((tb, D), lambda b: (b, 0)),
        compiler_params=pltpu.CompilerParams(
            dimension_semantics=("parallel",),
            vmem_limit_bytes=vmem_limit,
        ),
        cost_estimate=cost,
    )(x, w1, b1, w2_row)


def reference(x, w1, b1, w2):
    hi = jax.lax.Precision.HIGHEST
    h = jax.nn.relu(jnp.einsum("bfd,dh->bfh", x, w1, precision=hi) + b1)   # (B, F, H)
    s = jnp.einsum("bfh,ho->bfo", h, w2, precision=hi)                      # (B, F, 1)
    a = jax.nn.softmax(s, axis=1)
    return jnp.sum(a * x, axis=1)                                           # (B, D)


if __name__ == "__main__":
    B, F, D = 2, 8, 32
    H = 4 * D  # hidden_dim default = 4 * embedding_dim

    key = jax.random.PRNGKey(0)
    kx, kw1, kb1, kw2 = jax.random.split(key, 4)

    def bf16_exact(a):
        # Quantize MXU operands to bf16-representable f32 so the kernel/reference
        # comparison is insensitive to the backend's default f32-matmul precision
        # (XLA's DEFAULT rounds f32 MXU operands to bf16; Mosaic may not).
        return a.astype(jnp.bfloat16).astype(jnp.float32)

    x = bf16_exact(jax.random.normal(kx, (B, F, D), dtype=jnp.float32))
    # PyTorch Linear weight (H, D) stored transposed as (D, H); (H, 1) for the head.
    w1 = bf16_exact(jax.random.normal(kw1, (D, H), dtype=jnp.float32) * 0.1)
    b1 = jax.random.normal(kb1, (1, H), dtype=jnp.float32) * 0.1
    w2 = jax.random.normal(kw2, (H, 1), dtype=jnp.float32) * 0.1

    out = jax.block_until_ready(attentional_aggregation(x, w1, b1, w2))
    ref = reference(x, w1, b1, w2)

    assert out.shape == (B, D)
    max_err = jnp.max(jnp.abs(out - ref))
    assert jnp.allclose(out, ref, atol=1e-4, rtol=1e-4), (
        f"mismatch vs reference (max abs err {max_err})")
    print("KERNEL_OK")
</pallas_src>

<mosaic_0001>
module attributes {stable_mosaic.version = 11 : i64} {
  func.func @attn_agg_kernel(%arg0: i32, %arg1: memref<2x8x32xf32, #tpu.memory_space<vmem>>, %arg2: memref<32x128xf32, #tpu.memory_space<vmem>>, %arg3: memref<1x128xf32, #tpu.memory_space<vmem>>, %arg4: memref<1x128xf32, #tpu.memory_space<vmem>>, %arg5: memref<2x32xf32, #tpu.memory_space<vmem>>) attributes {dimension_semantics = [#tpu.dimension_semantics<parallel>], iteration_bounds = array<i64: 1>, scalar_prefetch = 0 : i64, scratch_operands = 0 : i64, tpu.core_type = #tpu.core_type<tc>, window_params = [{transform_indices = @transform_0, window_bounds = array<i64: 2, 8, 32>}, {pipeline_mode = #tpu.pipeline_mode<synchronous>, transform_indices = @transform_1, window_bounds = array<i64: 32, 128>}, {pipeline_mode = #tpu.pipeline_mode<synchronous>, transform_indices = @transform_2, window_bounds = array<i64: 1, 128>}, {pipeline_mode = #tpu.pipeline_mode<synchronous>, transform_indices = @transform_3, window_bounds = array<i64: 1, 128>}, {transform_indices = @transform_4, window_bounds = array<i64: 2, 32>}]} {
    %c0 = arith.constant 0 : index
    %c0_0 = arith.constant 0 : index
    %c0_1 = arith.constant 0 : index
    %0 = vector.load %arg1[%c0, %c0_0, %c0_1] : memref<2x8x32xf32, #tpu.memory_space<vmem>>, vector<2x8x32xf32>
    %1 = vector.shape_cast %0 : vector<2x8x32xf32> to vector<16x32xf32>
    %c0_2 = arith.constant 0 : index
    %c0_3 = arith.constant 0 : index
    %2 = vector.load %arg2[%c0_2, %c0_3] : memref<32x128xf32, #tpu.memory_space<vmem>>, vector<32x128xf32>
    %cst = arith.constant dense<0.000000e+00> : vector<16x128xf32>
    %3 = tpu.matmul %1, %2, %cst {dimension_numbers = #tpu.dot_dimension_numbers<[1], [0], [0], [1], [0, 0, 1, 1], [], []>} : vector<16x32xf32>, vector<32x128xf32>, vector<16x128xf32> -> vector<16x128xf32>
    %c0_4 = arith.constant 0 : index
    %c0_5 = arith.constant 0 : index
    %4 = vector.load %arg3[%c0_4, %c0_5] : memref<1x128xf32, #tpu.memory_space<vmem>>, vector<1x128xf32>
    %5 = vector.broadcast %4 : vector<1x128xf32> to vector<16x128xf32>
    %6 = arith.addf %3, %5 : vector<16x128xf32>
    %cst_6 = arith.constant 0.000000e+00 : f32
    %7 = vector.broadcast %cst_6 : f32 to vector<16x128xf32>
    %8 = arith.maximumf %6, %7 : vector<16x128xf32>
    %9 = vector.shape_cast %8 : vector<16x128xf32> to vector<2x8x128xf32>
    %c0_7 = arith.constant 0 : index
    %c0_8 = arith.constant 0 : index
    %10 = vector.load %arg4[%c0_7, %c0_8] : memref<1x128xf32, #tpu.memory_space<vmem>>, vector<1x128xf32>
    %11 = vector.shape_cast %10 : vector<1x128xf32> to vector<1x1x128xf32>
    %12 = vector.broadcast %11 : vector<1x1x128xf32> to vector<2x8x128xf32>
    %13 = arith.mulf %9, %12 : vector<2x8x128xf32>
    %cst_9 = arith.constant dense<0.000000e+00> : vector<2x8xf32>
    %14 = vector.multi_reduction <add>, %13, %cst_9 [2] : vector<2x8x128xf32> to vector<2x8xf32>
    %cst_10 = arith.constant dense<0xFF800000> : vector<2xf32>
    %15 = vector.multi_reduction <maximumf>, %14, %cst_10 [1] : vector<2x8xf32> to vector<2xf32>
    %16 = vector.shape_cast %15 : vector<2xf32> to vector<2x1xf32>
    %17 = vector.broadcast %16 : vector<2x1xf32> to vector<2x8xf32>
    %18 = arith.subf %14, %17 : vector<2x8xf32>
    %19 = math.exp %18 : vector<2x8xf32>
    %cst_11 = arith.constant dense<0.000000e+00> : vector<2xf32>
    %20 = vector.multi_reduction <add>, %19, %cst_11 [1] : vector<2x8xf32> to vector<2xf32>
    %21 = vector.shape_cast %20 : vector<2xf32> to vector<2x1xf32>
    %22 = vector.broadcast %21 : vector<2x1xf32> to vector<2x8xf32>
    %23 = arith.divf %19, %22 : vector<2x8xf32>
    %24 = vector.shape_cast %23 : vector<2x8xf32> to vector<2x8x1xf32>
    %25 = vector.broadcast %24 : vector<2x8x1xf32> to vector<2x8x32xf32>
    %26 = arith.mulf %25, %0 : vector<2x8x32xf32>
    %cst_12 = arith.constant dense<0.000000e+00> : vector<2x32xf32>
    %27 = vector.multi_reduction <add>, %26, %cst_12 [1] : vector<2x8x32xf32> to vector<2x32xf32>
    %c0_13 = arith.constant 0 : index
    %c0_14 = arith.constant 0 : index
    %28 = vector.load %arg5[%c0_13, %c0_14] : memref<2x32xf32, #tpu.memory_space<vmem>>, vector<2x32xf32>
    tpu.vector_store %arg5[%c0_13, %c0_14], %27 {strides = array<i32>} : memref<2x32xf32, #tpu.memory_space<vmem>>, vector<2x32xf32>,
    return
  }
  func.func @transform_0(%arg0: i32) -> (i32, i32, i32) {
    %c0_i32 = arith.constant 0 : i32
    %c0_i32_0 = arith.constant 0 : i32
    %c0_i32_1 = arith.constant 0 : i32
    return %arg0, %c0_i32, %c0_i32_0 : i32, i32, i32
  }
  func.func @transform_1(%arg0: i32) -> (i32, i32) {
    %c0_i32 = arith.constant 0 : i32
    %c0_i32_0 = arith.constant 0 : i32
    %c0_i32_1 = arith.constant 0 : i32
    return %c0_i32, %c0_i32_0 : i32, i32
  }
  func.func @transform_2(%arg0: i32) -> (i32, i32) {
    %c0_i32 = arith.constant 0 : i32
    %c0_i32_0 = arith.constant 0 : i32
    %c0_i32_1 = arith.constant 0 : i32
    return %c0_i32, %c0_i32_0 : i32, i32
  }
  func.func @transform_3(%arg0: i32) -> (i32, i32) {
    %c0_i32 = arith.constant 0 : i32
    %c0_i32_0 = arith.constant 0 : i32
    %c0_i32_1 = arith.constant 0 : i32
    return %c0_i32, %c0_i32_0 : i32, i32
  }
  func.func @transform_4(%arg0: i32) -> (i32, i32) {
    %c0_i32 = arith.constant 0 : i32
    %c0_i32_0 = arith.constant 0 : i32
    return %arg0, %c0_i32 : i32, i32
  }
}

</mosaic_0001>

<llo_original>
// kernel: tpu_custom_call.1
$region0: #{tpu_custom_call.1}
  #allocation0 [shape = 'u32[]', space=smem, size = 0x4, offset = 0x4, fixed_abs, tag = 'smem constant byte address 0x4 - core index']
  #allocation1 [shape = 'u32[72,128]{1,0:T(1,128)}', space=vmem, size = 0x9000, scoped, tag = 'internal scratch']
  %s0 = inlined_call_operand.hbm [shape: f32[2,8,32], index: 0, kind: input, shape index: {}]
  %s1 = inlined_call_operand.hbm [shape: f32[32,128], index: 1, kind: input, shape index: {}]
  %s2 = inlined_call_operand.vmem [shape: f32[1,128], index: 2, kind: input, shape index: {}]
  %s3 = inlined_call_operand.vmem [shape: f32[1,128], index: 3, kind: input, shape index: {}]
  %s4 = inlined_call_operand.hbm [shape: f32[2,32], index: 4, kind: output, shape index: {}]
  %s5 = sld [smem:[#allocation0]]
  $region34: #{tpu_custom_call.1} parent=0
    _
  %s7 = ssub.s32 1, %s5
  %s8 = scalar_select 0, %s7, %s5
  $region1: #{tpu_custom_call.1} parent=0
    #allocation2 [shape = 'u8[8192]{0}', space=vmem, size = 0x2000, scoped, tag = 'input window, operand 0, single buffered']
    #allocation3 [shape = 's32[1]{0}', space=sflag, size = 0x4, scoped, tag = 'scoped memory for tpu_custom_call.1']
    #allocation4 [shape = 's32[1]{0}', space=sflag, size = 0x4, scoped, tag = 'scoped memory for tpu_custom_call.1']
    #allocation5 [shape = 'u8[16384]{0}', space=vmem, size = 0x4000, scoped, tag = 'input window, operand 1, single buffered']
    #allocation6 [shape = 's32[1]{0}', space=sflag, size = 0x4, scoped, tag = 'scoped memory for tpu_custom_call.1']
    #allocation7 [shape = 'u8[1024]{0}', space=vmem, size = 0x400, scoped, tag = 'output window, operand 0, single buffered']
    %9 = vsyncpa [#allocation3], 0
    %10 = vsyncpa [#allocation6], 0
    %11 = vsyncpa [#allocation4], 0
    // Predicated region
    $region2: #{tpu_custom_call.1} parent=1 // pred_check
      _
    $region3: #{tpu_custom_call.1} parent=1 // pred_check_branch
      %13 = sbr.rel (0) target = $region5
    $region4: #{tpu_custom_call.1} parent=1 // pred_region
      %15 = vsyncadd [#allocation3], 0
      %s16 = sshll.u32 %s0, 4
      %s17 = int_to_ptr.hbm [resolvable:$true] %s16
      %s18 = sshll.u32 [#allocation2], 4
      %s19 = int_to_ptr.vmem [resolvable:$true] %s18
      %24 = dma.hbm_to_vmem [thread:$0]  %s17, 256, %s19, [#allocation3], 128, 128, 8
    $region5: #{tpu_custom_call.1} parent=1 // pred_fallthru
      _
    // Predicated region
    $region6: #{tpu_custom_call.1} parent=1 // pred_check
      _
    $region7: #{tpu_custom_call.1} parent=1 // pred_check_branch
      %26 = sbr.rel (0) target = $region9
    $region8: #{tpu_custom_call.1} parent=1 // pred_region
      %28 = vsyncadd [#allocation6], 0
      %s29 = sshll.u32 %s1, 4
      %s30 = int_to_ptr.hbm [resolvable:$true] %s29
      %s31 = sshll.u32 [#allocation5], 4
      %s32 = int_to_ptr.vmem [resolvable:$true] %s31
      %37 = dma.hbm_to_vmem [thread:$0]  %s30, 512, %s32, [#allocation6], 128, 128, 8
    $region9: #{tpu_custom_call.1} parent=1 // pred_fallthru
      _
    // Predicated region
    $region10: #{tpu_custom_call.1} parent=1 // pred_check
      _
    $region11: #{tpu_custom_call.1} parent=1 // pred_check_branch
      %39 = sbr.rel (0) target = $region13
    $region12: #{tpu_custom_call.1} parent=1 // pred_region
      _
    $region13: #{tpu_custom_call.1} parent=1 // pred_fallthru
      _
    // Predicated region
    $region14: #{tpu_custom_call.1} parent=1 // pred_check
      _
    $region15: #{tpu_custom_call.1} parent=1 // pred_check_branch
      %41 = sbr.rel (0) target = $region17
    $region16: #{tpu_custom_call.1} parent=1 // pred_region
      _
    $region17: #{tpu_custom_call.1} parent=1 // pred_fallthru
      _
    // Predicated region
    $region18: #{tpu_custom_call.1} parent=1 // pred_check
      _
    $region19: #{tpu_custom_call.1} parent=1 // pred_check_branch
      %43 = sbr.rel (0) target = $region21
    $region20: #{tpu_custom_call.1} parent=1 // pred_region
      %45 = dma.done [#allocation3], 256
    $region21: #{tpu_custom_call.1} parent=1 // pred_fallthru
      _
    // Predicated region
    $region22: #{tpu_custom_call.1} parent=1 // pred_check
      _
    $region23: #{tpu_custom_call.1} parent=1 // pred_check_branch
      %47 = sbr.rel (0) target = $region25
    $region24: #{tpu_custom_call.1} parent=1 // pred_region
      %49 = dma.done [#allocation6], 512
    $region25: #{tpu_custom_call.1} parent=1 // pred_fallthru
      _
    %v50 = vld [vmem:[#allocation2] sm:$0xff]
    %v51 = vld [vmem:[#allocation2 + $0x8] sm:$0xff]
    %v52 = vld [vmem:[#allocation5] sm:$0xff]
    %v53 = vld [vmem:[#allocation5 + $0x8] sm:$0xff]
    %v54 = vld [vmem:[#allocation5 + $0x10] sm:$0xff]
    %v55 = vld [vmem:[#allocation5 + $0x18] sm:$0xff]
    %v56 = vld [vmem:[%s2] sm:$0x1]
    %v58 = vperm.slane %v56, 0
    %vm60 = vcmask 261120
    %v62 = vsel %vm60, %v50, 0
    %v65 = vsel %vm60, %v51, 0
    %67 = vmatpush.msra.mxu0 0.0
    %68 = vmatpush.msra.mxu0 0.0
    %69 = vmatpush.msra.mxu0 0.0
    %70 = vmatpush.msra.mxu0 0.0
    %71 = vmatpush.msra.mxu0 0.0
    %72 = vmatpush.msra.mxu0 0.0
    %73 = vmatpush.msra.mxu0 0.0
    %74 = vmatpush.msra.mxu0 0.0
    %75 = vmatpush.msra.mxu0 0.0
    %76 = vmatpush.msra.mxu0 0.0
    %77 = vmatpush.msra.mxu0 0.0
    %78 = vmatpush.msra.mxu0 0.0
    %79 = vmatpush.msra.mxu0 %v55
    %80 = vmatpush.msra.mxu0 %v54
    %81 = vmatpush.msra.mxu0 %v53
    %82 = vmatpush.msra.mxu0 %v52
    %83 = vmatmul.f32.gmra.mxu0 %v62
    %v84 = vpop.f32.mrf.mxu0
    %v85 = vadd.f32 %v58, %v84
    %86 = vmatmul.f32.gmra.mxu0 %v65
    %v87 = vpop.f32.mrf.mxu0
    %v88 = vadd.f32 %v58, %v87
    %89 = vdwg.mxu0
    %v90 = vmax.f32 %v85, 0.0
    %v91 = vmax.f32 %v88, 0.0
    %v92 = vld [vmem:[%s3] sm:$0x1]
    %v94 = vperm.slane %v92, 0
    %v96 = vmul.f32 %v90, %v94
    %v97 = vmul.f32 %v91, %v94
    %98 = vadd.xlane.f32.xlu0 %v96
    %v99 = vpop.xlane.xlu0 %98
    %100 = vadd.xlane.f32.xlu0 %v97
    %v101 = vpop.xlane.xlu0 %100
    %v104 = vlaneseq
    %v105 = vand.u32 %v104, 127
    %v106 = vperm.slane %v99, %v105
    %v107 = vperm.slane %v101, %v105
    %vm108 = vcmask 1041409
    %v109 = vsel %vm108, %v107, %v106
    %vm111 = vcmask 58368
    %v112 = vsel %vm111, %v109, -inf
    %113 = vmax.xlane.f32.xlu0 %v112
    %v114 = vpop.xlane.xlu0 %113
    %v116 = vperm.slane %v114, 0
    %v117 = vperm.slane %v114, 1
    %v120 = vsub.f32 %v99, %v116
    %v121 = vsub.f32 %v101, %v117
    %v122 = vmul.f32 %v120, 1.442695
    %v123 = vpow.pop %v122
    %v124 = vmul.f32 %v121, 1.442695
    %v125 = vpow.pop %v124
    %128 = vset.pattern.permute.xlu0 0
    %129 = vperm.xlu0 %128, %v123
    %v130 = vpop.permute.xlu0 %129
    %131 = vset.pattern.permute.xlu0 0
    %132 = vperm.xlu0 %131, %v125
    %v133 = vpop.permute.xlu0 %132
    %v134 = vperm.slane %v130, %v105
    %v135 = vperm.slane %v133, %v105
    %v136 = vsel %vm108, %v135, %v134
    %v138 = vsel %vm111, %v136, 0.0
    %139 = vadd.xlane.f32.xlu0 %v138
    %v140 = vpop.xlane.xlu0 %139
    %v142 = vperm.slane %v140, 0
    %v143 = vperm.slane %v140, 1
    %v146 = vrcp.pop %v142
    %v147 = vmul.f32 %v142, %v146
    %v148 = vsub.f32 1.0, %v147
    %v149 = vmul.f32 %v146, %v148
    %v150 = vadd.f32 %v146, %v149
    %vm151 = vweird.f32 %v142
    %vm152 = vweird.f32 %v146
    %vm153 = vmor %vm151, %vm152
    %v154 = vsel %vm153, %v146, %v150
    %v155 = vand.u32 2147483647, %v142
    %vm156 = vcmp.eq.f32.partialorder %v155, 8.507059e+37
    %v157 = vand.u32 %v142, 2147483648
    %v158 = vor.u32 1.1754944e-38, %v157
    %v159 = vsel %vm156, %v158, %v154
    %v160 = vmul.f32 %v123, %v159
    %v161 = vrcp.pop %v143
    %v162 = vmul.f32 %v143, %v161
    %v163 = vsub.f32 1.0, %v162
    %v164 = vmul.f32 %v161, %v163
    %v165 = vadd.f32 %v161, %v164
    %vm166 = vweird.f32 %v143
    %vm167 = vweird.f32 %v161
    %vm168 = vmor %vm166, %vm167
    %v169 = vsel %vm168, %v161, %v165
    %v170 = vand.u32 2147483647, %v143
    %vm171 = vcmp.eq.f32.partialorder %v170, 8.507059e+37
    %v172 = vand.u32 %v143, 2147483648
    %v173 = vor.u32 1.1754944e-38, %v172
    %v174 = vsel %vm171, %v173, %v169
    %v175 = vmul.f32 %v125, %v174
    %177 = vset.pattern.permute.xlu0 0
    %178 = vperm.xlu0 %177, %v160
    %v179 = vpop.permute.xlu0 %178
    %182 = vset.pattern.permute.xlu0 0
    %183 = vperm.xlu0 %182, %v175
    %v184 = vpop.permute.xlu0 %183
    %v186 = vmul.f32 %v179, %v50
    %v187 = vmul.f32 %v184, %v51
    %v188 = vsel %vm60, %v186, 0.0
    %v189 = vrot.slane %v188, 4
    %v190 = vadd.f32 %v188, %v189
    %v191 = vrot.slane %v190, 2
    %v192 = vadd.f32 %v190, %v191
    %v193 = vrot.slane %v192, 1
    %v194 = vadd.f32 %v192, %v193
    %v195 = vsel %vm60, %v187, 0.0
    %v196 = vrot.slane %v195, 4
    %v197 = vadd.f32 %v195, %v196
    %v198 = vrot.slane %v197, 2
    %v199 = vadd.f32 %v197, %v198
    %v200 = vrot.slane %v199, 1
    %v201 = vadd.f32 %v199, %v200
    %v204 = vsel %vm108, %v201, %v194
    %vm206 = vcmask 254976
    %207 = vst.msk [vmem:[#allocation7] sm:$0x3] %vm206, %v204
    // Predicated region
    $region26: #{tpu_custom_call.1} parent=1 // pred_check
      _
    $region27: #{tpu_custom_call.1} parent=1 // pred_check_branch
      %209 = sbr.rel (0) target = $region29
    $region28: #{tpu_custom_call.1} parent=1 // pred_region
      %211 = vsyncadd [#allocation4], 0
      %s213 = sshll.u32 [#allocation7], 4
      %s214 = int_to_ptr.vmem [resolvable:$true] %s213
      %s215 = sshll.u32 %s4, 4
      %s216 = int_to_ptr.hbm [resolvable:$true] %s215
      %218 = dma.vmem_to_hbm [thread:$0]  %s214, 32, %s216, [#allocation4]
    $region29: #{tpu_custom_call.1} parent=1 // pred_fallthru
      _
    // Predicated region
    $region30: #{tpu_custom_call.1} parent=1 // pred_check
      _
    $region31: #{tpu_custom_call.1} parent=1 // pred_check_branch
      %220 = sbr.rel (0) target = $region33
    $region32: #{tpu_custom_call.1} parent=1 // pred_region
      %222 = dma.done [#allocation4], 32
    $region33: #{tpu_custom_call.1} parent=1 // pred_fallthru
      _
    %223 = vsyncpa [#allocation3], 1
    %224 = vsyncpa [#allocation6], 1
    %225 = vsyncpa [#allocation4], 1

</llo_original>
